<compile_context>
chip_gen: v7x
topology: tpu7x:2x2x1
jax: 0.10.0
libtpu: 0.0.40
codegen_flags: <defaults>
</compile_context>

<pallas_src>
import functools

import jax
import jax.numpy as jnp
from jax.experimental import pallas as pl
from jax.experimental.pallas import tpu as pltpu


def _gaussian_mf_kernel(x_ref, c_ref, g_ref, o_ref):
    # x_ref: (1, TILE_B)  c_ref: (T, 1)  g_ref: (T, 1)  o_ref: (T, TILE_B)
    x = x_ref[...]                       # (1, TILE_B)  lane-dense
    c = c_ref[...]                       # (T, 1)
    g = g_ref[...]                       # (T, 1)       gamma = -1/(2*sigma^2)
    d = x - c                            # broadcast -> (T, TILE_B)  (VPU)
    o_ref[...] = jnp.exp(d * d * g)      # single EUP op per element


@functools.partial(jax.jit, static_argnames=("tile_b",))
def gaussian_membership_forward(x, centers, gamma, *, tile_b=65536):
    """x: [B, 1] float32; centers/gamma: [n_terms] float32 -> [B, n_terms].

    gamma_j must equal -1 / (2 * sigma_j ** 2).
    """
    B = x.shape[0]
    T = centers.shape[0]

    # Transposed working layout: batch on lanes.
    xT = x.astype(jnp.float32).reshape(1, B)          # [B,1] -> [1,B]

    # Tile size: multiple of 128, no larger than the padded batch, and capped
    # so one output tile stays ~<=4 MiB (double-buffered -> <=8 MiB of VMEM),
    # which fits comfortably on v5e/v6e (32 MiB scoped) and v7x (64 MiB VMEM).
    max_tb_vmem = (4 * 1024 * 1024) // (4 * max(T, 1))
    tb = min(int(tile_b), max_tb_vmem)
    tb = max(128, (tb // 128) * 128)
    tb = min(tb, 128 * pl.cdiv(B, 128))
    tb = max(tb, 128)

    B_pad = tb * pl.cdiv(B, tb)
    if B_pad != B:
        xT = jnp.pad(xT, ((0, 0), (0, B_pad - B)))

    c2d = centers.astype(jnp.float32).reshape(T, 1)
    g2d = gamma.astype(jnp.float32).reshape(T, 1)

    outT = pl.pallas_call(
        _gaussian_mf_kernel,
        out_shape=jax.ShapeDtypeStruct((T, B_pad), jnp.float32),
        grid=(B_pad // tb,),
        in_specs=[
            pl.BlockSpec((1, tb), lambda i: (0, i)),   # streamed batch tile
            pl.BlockSpec((T, 1), lambda i: (0, 0)),    # resident params
            pl.BlockSpec((T, 1), lambda i: (0, 0)),    # resident params
        ],
        out_specs=pl.BlockSpec((T, tb), lambda i: (0, i)),
        compiler_params=pltpu.CompilerParams(
            dimension_semantics=("parallel",),
            vmem_limit_bytes=32 * 1024 * 1024,
        ),
    )(xT, c2d, g2d)

    # Trim padding and return the contract layout [B, T].
    return outT[:, :B].T


class GaussianMembershipFunction:
    """Minimal JAX-side analogue of the PyTorch MembershipFunction contract."""

    def __init__(self, centers, sigmas):
        centers = jnp.asarray(centers, jnp.float32)
        sigmas = jnp.asarray(sigmas, jnp.float32)
        self._n_terms = int(centers.shape[0])
        if self._n_terms < 3:
            raise ValueError('Membership function must have at least 3 terms!')
        self.centers = centers
        self.sigmas = sigmas
        # Hoist -1/(2*sigma^2) out of the per-element kernel path (EUP only
        # does the exp inside the kernel).  Guard against sigma == 0.
        safe_sigma = jnp.maximum(jnp.abs(sigmas), jnp.float32(1e-12))
        self.gamma = -1.0 / (2.0 * safe_sigma * safe_sigma)

    @property
    def n_terms(self):
        return self._n_terms

    def get_peak_values(self):
        return self.centers

    def __call__(self, x):
        return gaussian_membership_forward(x, self.centers, self.gamma)

    def extra_repr(self):
        return f'n_terms={self.n_terms}'


if __name__ == "__main__":
    key = jax.random.PRNGKey(0)

    batch = 8
    n_terms = 5

    # Deterministic parameter init (one center / width per term).
    centers = jnp.linspace(-2.0, 2.0, n_terms, dtype=jnp.float32)
    sigmas = jnp.full((n_terms,), 0.5, dtype=jnp.float32)

    mf = GaussianMembershipFunction(centers, sigmas)

    # Input shape per the module docstring: [batch_size, 1].
    x = jax.random.normal(key, (batch, 1), dtype=jnp.float32)

    out = mf(x)
    out = jax.block_until_ready(out)

    # Pure-JAX reference check.
    ref = jnp.exp(-((x - centers[None, :]) ** 2) / (2.0 * sigmas[None, :] ** 2))
    assert out.shape == (batch, n_terms)
    assert jnp.allclose(out, ref, atol=1e-5, rtol=1e-5)

    # Also exercise a non-multiple-of-tile batch to cover the padded path.
    x2 = jax.random.normal(jax.random.PRNGKey(1), (300, 1), dtype=jnp.float32)
    out2 = jax.block_until_ready(mf(x2))
    ref2 = jnp.exp(-((x2 - centers[None, :]) ** 2) / (2.0 * sigmas[None, :] ** 2))
    assert out2.shape == (300, n_terms)
    assert jnp.allclose(out2, ref2, atol=1e-5, rtol=1e-5)

    print("KERNEL_OK")
</pallas_src>

<mosaic_0001>
module attributes {stable_mosaic.version = 11 : i64} {
  func.func @_gaussian_mf_kernel(%arg0: i32, %arg1: memref<1x128xf32, #tpu.memory_space<vmem>>, %arg2: memref<5x1xf32, #tpu.memory_space<vmem>>, %arg3: memref<5x1xf32, #tpu.memory_space<vmem>>, %arg4: memref<5x128xf32, #tpu.memory_space<vmem>>) attributes {dimension_semantics = [#tpu.dimension_semantics<parallel>], iteration_bounds = array<i64: 1>, scalar_prefetch = 0 : i64, scratch_operands = 0 : i64, tpu.core_type = #tpu.core_type<tc>, window_params = [{transform_indices = @transform_0, window_bounds = array<i64: 1, 128>}, {pipeline_mode = #tpu.pipeline_mode<synchronous>, transform_indices = @transform_1, window_bounds = array<i64: 5, 1>}, {pipeline_mode = #tpu.pipeline_mode<synchronous>, transform_indices = @transform_2, window_bounds = array<i64: 5, 1>}, {transform_indices = @transform_3, window_bounds = array<i64: 5, 128>}]} {
    %c0 = arith.constant 0 : index
    %c0_0 = arith.constant 0 : index
    %0 = vector.load %arg1[%c0, %c0_0] : memref<1x128xf32, #tpu.memory_space<vmem>>, vector<1x128xf32>
    %c0_1 = arith.constant 0 : index
    %c0_2 = arith.constant 0 : index
    %1 = vector.load %arg2[%c0_1, %c0_2] : memref<5x1xf32, #tpu.memory_space<vmem>>, vector<5x1xf32>
    %c0_3 = arith.constant 0 : index
    %c0_4 = arith.constant 0 : index
    %2 = vector.load %arg3[%c0_3, %c0_4] : memref<5x1xf32, #tpu.memory_space<vmem>>, vector<5x1xf32>
    %3 = vector.broadcast %0 : vector<1x128xf32> to vector<5x128xf32>
    %4 = vector.broadcast %1 : vector<5x1xf32> to vector<5x128xf32>
    %5 = arith.subf %3, %4 : vector<5x128xf32>
    %6 = arith.mulf %5, %5 : vector<5x128xf32>
    %7 = vector.broadcast %2 : vector<5x1xf32> to vector<5x128xf32>
    %8 = arith.mulf %6, %7 : vector<5x128xf32>
    %9 = math.exp %8 : vector<5x128xf32>
    %c0_5 = arith.constant 0 : index
    %c0_6 = arith.constant 0 : index
    %10 = vector.load %arg4[%c0_5, %c0_6] : memref<5x128xf32, #tpu.memory_space<vmem>>, vector<5x128xf32>
    tpu.vector_store %arg4[%c0_5, %c0_6], %9 {strides = array<i32>} : memref<5x128xf32, #tpu.memory_space<vmem>>, vector<5x128xf32>,
    return
  }
  func.func @transform_0(%arg0: i32) -> (i32, i32) {
    %c0_i32 = arith.constant 0 : i32
    %c0_i32_0 = arith.constant 0 : i32
    return %c0_i32, %arg0 : i32, i32
  }
  func.func @transform_1(%arg0: i32) -> (i32, i32) {
    %c0_i32 = arith.constant 0 : i32
    %c0_i32_0 = arith.constant 0 : i32
    %c0_i32_1 = arith.constant 0 : i32
    return %c0_i32, %c0_i32_0 : i32, i32
  }
  func.func @transform_2(%arg0: i32) -> (i32, i32) {
    %c0_i32 = arith.constant 0 : i32
    %c0_i32_0 = arith.constant 0 : i32
    %c0_i32_1 = arith.constant 0 : i32
    return %c0_i32, %c0_i32_0 : i32, i32
  }
  func.func @transform_3(%arg0: i32) -> (i32, i32) {
    %c0_i32 = arith.constant 0 : i32
    %c0_i32_0 = arith.constant 0 : i32
    return %c0_i32, %arg0 : i32, i32
  }
}

</mosaic_0001>

<llo_original>
// kernel: gaussian_membership_forward.1
$region0: #{gaussian_membership_forward.1}
  #allocation0 [shape = 'u32[]', space=smem, size = 0x4, offset = 0x4, fixed_abs, tag = 'smem constant byte address 0x4 - core index']
  #allocation1 [shape = 'u32[144,128]{1,0:T(1,128)}', space=vmem, size = 0x12000, scoped, tag = 'internal scratch']
  %s0 = inlined_call_operand.vmem [shape: f32[1,128], index: 0, kind: input, shape index: {}]
  %s1 = inlined_call_operand.vmem [shape: f32[5,1], index: 1, kind: input, shape index: {}]
  %s2 = inlined_call_operand.vmem [shape: f32[5,1], index: 2, kind: input, shape index: {}]
  %s3 = inlined_call_operand.vmem [shape: f32[5,128], index: 3, kind: output, shape index: {}]
  %s4 = sld [smem:[#allocation0]]
  $region22: #{gaussian_membership_forward.1} parent=0
    _
  %s6 = ssub.s32 1, %s4
  %s7 = scalar_select 0, %s6, %s4
  // Predicated region
  $region2: #{gaussian_membership_forward.1} parent=0 // pred_check
    _
  $region3: #{gaussian_membership_forward.1} parent=0 // pred_check_branch
    %9 = sbr.rel (0) target = $region5
  $region4: #{gaussian_membership_forward.1} parent=0 // pred_region
    _
  $region5: #{gaussian_membership_forward.1} parent=0 // pred_fallthru
    _
  // Predicated region
  $region6: #{gaussian_membership_forward.1} parent=0 // pred_check
    _
  $region7: #{gaussian_membership_forward.1} parent=0 // pred_check_branch
    %11 = sbr.rel (0) target = $region9
  $region8: #{gaussian_membership_forward.1} parent=0 // pred_region
    _
  $region9: #{gaussian_membership_forward.1} parent=0 // pred_fallthru
    _
  // Predicated region
  $region10: #{gaussian_membership_forward.1} parent=0 // pred_check
    _
  $region11: #{gaussian_membership_forward.1} parent=0 // pred_check_branch
    %13 = sbr.rel (0) target = $region13
  $region12: #{gaussian_membership_forward.1} parent=0 // pred_region
    _
  $region13: #{gaussian_membership_forward.1} parent=0 // pred_fallthru
    _
  %v14 = vld [vmem:[%s0] sm:$0x1]
  %v15 = vld [vmem:[%s1] sm:$0x1f]
  %v16 = vld [vmem:[%s2] sm:$0x1f]
  %v18 = vlaneseq
  %v19 = vshrl.u32 %v18, 7
  %v20 = vsub.s32 0, %v19
  %v21 = vrot.slane %v14, %v20
  %24 = vset.pattern.permute.xlu0 0
  %25 = vperm.xlu0 %24, %v15
  %v26 = vpop.permute.xlu0 %25
  %v28 = vsub.f32 %v21, %v26
  %v29 = vmul.f32 %v28, %v28
  %31 = vset.pattern.permute.xlu0 0
  %32 = vperm.xlu0 %31, %v16
  %v33 = vpop.permute.xlu0 %32
  %v35 = vmul.f32 %v29, %v33
  %v36 = vmul.f32 %v35, 1.442695
  %v37 = vpow.pop %v36
  %38 = vst [vmem:[%s3] sm:$0x1f] %v37
  // Predicated region
  $region14: #{gaussian_membership_forward.1} parent=0 // pred_check
    _
  $region15: #{gaussian_membership_forward.1} parent=0 // pred_check_branch
    %40 = sbr.rel (0) target = $region17
  $region16: #{gaussian_membership_forward.1} parent=0 // pred_region
    _
  $region17: #{gaussian_membership_forward.1} parent=0 // pred_fallthru
    _
  // Predicated region
  $region18: #{gaussian_membership_forward.1} parent=0 // pred_check
    _
  $region19: #{gaussian_membership_forward.1} parent=0 // pred_check_branch
    %42 = sbr.rel (0) target = $region21
  $region20: #{gaussian_membership_forward.1} parent=0 // pred_region
    _
  $region21: #{gaussian_membership_forward.1} parent=0 // pred_fallthru
    _

</llo_original>
